<compile_context>
chip_gen: v6e
topology: v6e:2x2x1
jax: 0.10.0
libtpu: 0.0.40
codegen_flags: <defaults>
</compile_context>

<pallas_src>
import functools

import jax
import jax.numpy as jnp
from jax.experimental import pallas as pl
from jax.experimental.pallas import tpu as pltpu

RADIUS_EARTH = 3440.1  # nautical miles

# Deterministic "parameters": lat/lon scaling bounds (module-level globals in
# geographic_utils.py); fixed here as deterministic constants.
MIN_LAT, MAX_LAT = 32.0, 38.0
MIN_LON, MAX_LON = -124.0, -118.0

LANES = 128
TILE_ROWS = 4096        # (4096, 128) f32 block = 2 MiB; x2 inputs x2 buffers = 8 MiB VMEM
SMALL_TOTAL = 1 << 20   # below this many elements a fused XLA reduction wins


def _dist_kernel(p_ref, t_ref, out_ref, *, rows, tile_rows, squared, need_row_mask):
    """One (tile_rows, 128) lane-dense tile of the flattened pred/target data.

    Emits a (1, 1, 128) per-tile partial sum per lane; the wrapper keeps only
    the lat lanes (lane % feature_size == 0) and sums the tiny result.
    """
    x1 = p_ref[...].astype(jnp.float32)
    x2 = t_ref[...].astype(jnp.float32)

    # scale_values, reproducing the upstream behaviour exactly: lon is derived
    # from the already-scaled *lat*, so the lon feature channel never matters.
    s1 = (MAX_LAT - MIN_LAT) * x1 + MIN_LAT
    s2 = (MAX_LAT - MIN_LAT) * x2 + MIN_LAT
    l1 = (MAX_LON - MIN_LON) * s1 + MIN_LON
    l2 = (MAX_LON - MIN_LON) * s2 + MIN_LON

    dlat = s2 - s1
    dlon = l2 - l1
    d2 = dlat * dlat + (dlon * jnp.cos((s1 + s2) * 0.5)) ** 2 + 1e-24
    if squared:
        # (R * sqrt(d2))**2 == R^2 * d2 up to rounding -> skip the sqrt.
        val = (RADIUS_EARTH * RADIUS_EARTH) * d2
    else:
        val = RADIUS_EARTH * jnp.sqrt(d2)

    if need_row_mask:
        # Only the last grid block is partial; garbage rows in the unfilled
        # VMEM region are zeroed. Row-level bound only -> no int32 overflow.
        row = jax.lax.broadcasted_iota(jnp.int32, (tile_rows, LANES), 0)
        remaining = rows - pl.program_id(0) * tile_rows
        val = jnp.where(row < remaining, val, 0.0)

    out_ref[...] = jnp.sum(val, axis=0).reshape(1, 1, LANES)


def _jax_dist_sum(lat1, lat2, *, squared):
    """Plain-JAX sum of dist (or dist**2) from raw (unscaled) lat channels."""
    lat1 = lat1.astype(jnp.float32)
    lat2 = lat2.astype(jnp.float32)
    s1 = (MAX_LAT - MIN_LAT) * lat1 + MIN_LAT
    s2 = (MAX_LAT - MIN_LAT) * lat2 + MIN_LAT
    l1 = (MAX_LON - MIN_LON) * s1 + MIN_LON
    l2 = (MAX_LON - MIN_LON) * s2 + MIN_LON
    dlat = s2 - s1
    dlon = l2 - l1
    d2 = dlat * dlat + (dlon * jnp.cos((s1 + s2) * 0.5)) ** 2 + 1e-24
    if squared:
        return jnp.sum((RADIUS_EARTH * RADIUS_EARTH) * d2)
    return jnp.sum(RADIUS_EARTH * jnp.sqrt(d2))


def _dist_sum(pred, tgt, *, squared, force_pallas=False):
    """sum over all (b, n, t) of dist (or dist**2 when squared=True)."""
    feat = int(pred.shape[-1])
    total = int(pred.size)
    rows = total // LANES

    use_pallas = (force_pallas or total >= SMALL_TOTAL) and (128 % feat == 0) and rows > 0
    if not use_pallas:
        # Tiny inputs / unsupported feature stride: one fused XLA pass.
        return _jax_dist_sum(pred[..., 0], tgt[..., 0], squared=squared)

    flat_p = pred.reshape(-1)   # free row-major reshape, keeps input dtype
    flat_t = tgt.reshape(-1)
    aligned = rows * LANES

    tail = None
    if aligned != total:
        # Ragged tail (< 128 elements): tiny plain-JAX epilogue (no jnp.pad of
        # the full tensors). The prefix slice is only taken in this rare case.
        tp = flat_p[aligned:]
        tt = flat_t[aligned:]
        tail = _jax_dist_sum(tp[::feat], tt[::feat], squared=squared)
        flat_p = flat_p[:aligned]
        flat_t = flat_t[:aligned]

    p2 = flat_p.reshape(rows, LANES)
    t2 = flat_t.reshape(rows, LANES)

    # Tile size: big for pipelining, but keep >= 2 tiles when possible so both
    # v7x TensorCores get work (grid axis is "parallel").
    tr = TILE_ROWS
    if rows <= tr:
        tr = max(8, (((rows + 1) // 2) + 7) // 8 * 8)
        if tr >= rows:
            tr = rows  # single full-extent block (always a legal block shape)
    num_tiles = pl.cdiv(rows, tr)
    need_row_mask = (rows % tr) != 0

    kernel = functools.partial(_dist_kernel, rows=rows, tile_rows=tr,
                               squared=squared, need_row_mask=need_row_mask)
    in_spec = pl.BlockSpec((tr, LANES), lambda i: (i, 0))
    out_spec = pl.BlockSpec((1, 1, LANES), lambda i: (i, 0, 0))

    psums = pl.pallas_call(
        kernel,
        grid=(num_tiles,),
        in_specs=[in_spec, in_spec],
        out_specs=out_spec,
        out_shape=jax.ShapeDtypeStruct((num_tiles, 1, LANES), jnp.float32),
        compiler_params=pltpu.CompilerParams(
            dimension_semantics=("parallel",)),
    )(p2, t2)

    # Keep only the lat lanes (flat % feat == lane % feat since 128 % feat == 0);
    # this tiny wrapper-side slice replaces any in-kernel lane mask.
    out = jnp.sum(psums[:, :, ::feat])
    if tail is not None:
        out = out + tail
    return out


def displacement_error_forward(prediction, target, vessel_count, method="mean",
                               force_pallas=False):
    """Pallas implementation of displacement_error.forward (interaction=False)."""
    # TODO(synk): interaction=True branch (compare_mat / get_features pairwise
    # MSE with data-dependent min-masking) is not implemented.
    T = prediction.shape[2]
    vsum = jnp.sum(vessel_count.astype(jnp.float32))

    if method == "mean":
        s = _dist_sum(prediction, target, squared=False, force_pallas=force_pallas)
        dist_error = s / (vsum * T)
    elif method == "mean_squared":
        s = _dist_sum(prediction, target, squared=True, force_pallas=force_pallas)
        dist_error = s / (vsum * T)
    elif method == "final":
        s = _dist_sum(prediction[:, :, -1:, :], target[:, :, -1:, :],
                      squared=False, force_pallas=force_pallas)
        dist_error = s / vsum
    else:
        raise ValueError(method)

    error = dist_error  # interaction=False path: error == dist_error
    return error, dist_error


# ----------------------------- pure-JAX reference -----------------------------
def _scale_values_ref(lat, lon):
    # Mirrors the PyTorch scale_values (including the lon-from-scaled-lat bug).
    lat = (MAX_LAT - MIN_LAT) * lat + MIN_LAT
    lon = (MAX_LON - MIN_LON) * lat + MIN_LON
    return lat, lon


def _ref_forward(prediction, target, vessel_count, method="mean"):
    lat1, lon1 = prediction[..., 0], prediction[..., 1]
    lat2, lon2 = target[..., 0], target[..., 1]
    s_lat1, s_lon1 = _scale_values_ref(lat1, lon1)
    s_lat2, s_lon2 = _scale_values_ref(lat2, lon2)
    dlon = s_lon2 - s_lon1
    dlat = s_lat2 - s_lat1
    dist = dlat ** 2 + (dlon * jnp.cos((s_lat1 + s_lat2) / 2)) ** 2
    dist = RADIUS_EARTH * jnp.sqrt(dist + 1e-24)
    T = prediction.shape[2]
    vsum = jnp.sum(vessel_count.astype(jnp.float32))
    if method == "mean":
        de = jnp.sum(dist) / (vsum * T)
    elif method == "final":
        de = jnp.sum(dist[..., -1]) / vsum
    else:
        de = jnp.sum(dist ** 2) / (vsum * T)
    return de, de


if __name__ == "__main__":
    key = jax.random.PRNGKey(0)
    k1, k2 = jax.random.split(key)

    # 1) Small shapes through the public API (auto fast path).
    B, N, T, F = 2, 4, 8, 2  # batch, vessels, prediction_length, feature_size
    prediction = jax.random.uniform(k1, (B, N, T, F), dtype=jnp.float32)
    target = jax.random.uniform(k2, (B, N, T, F), dtype=jnp.float32)
    vessel_count = jnp.full((B,), N, dtype=jnp.float32)

    for method in ("mean", "final", "mean_squared"):
        error, dist_error = displacement_error_forward(
            prediction, target, vessel_count, method=method)
        error = jax.block_until_ready(error)
        ref_err, ref_de = _ref_forward(prediction, target, vessel_count, method=method)
        assert jnp.allclose(error, ref_err, rtol=1e-4), (method, error, ref_err)
        assert jnp.allclose(dist_error, ref_de, rtol=1e-4), (method, dist_error, ref_de)

    # 2) Force the Pallas kernel on small shapes: aligned 2-tile case, and a
    #    ragged-tail + partial-last-block case.
    for shape in ((2, 8, 64, 2),    # total = 2048: aligned, 2 tiles
                  (2, 9, 40, 2)):   # total = 1440: ragged tail + partial block
        kp, kt = jax.random.split(jax.random.fold_in(key, shape[1]))
        p = jax.random.uniform(kp, shape, dtype=jnp.float32)
        t = jax.random.uniform(kt, shape, dtype=jnp.float32)
        vc = jnp.full((shape[0],), shape[1], dtype=jnp.float32)
        for method in ("mean", "mean_squared", "final"):
            error, dist_error = displacement_error_forward(
                p, t, vc, method=method, force_pallas=True)
            error = jax.block_until_ready(error)
            ref_err, ref_de = _ref_forward(p, t, vc, method=method)
            assert jnp.allclose(error, ref_err, rtol=1e-4), (shape, method, error, ref_err)
            assert jnp.allclose(dist_error, ref_de, rtol=1e-4), (shape, method, dist_error, ref_de)

    # 3) bf16 inputs stream directly into the kernel (f32 cast happens on the
    #    VMEM block); compare against the module's own plain-JAX path.
    p16 = jax.random.uniform(k1, (2, 8, 64, 2), dtype=jnp.float32).astype(jnp.bfloat16)
    t16 = jax.random.uniform(k2, (2, 8, 64, 2), dtype=jnp.float32).astype(jnp.bfloat16)
    vc = jnp.full((2,), 8, dtype=jnp.float32)
    for method in ("mean", "mean_squared"):
        a, _ = displacement_error_forward(p16, t16, vc, method=method, force_pallas=True)
        b, _ = displacement_error_forward(p16, t16, vc, method=method, force_pallas=False)
        a = jax.block_until_ready(a)
        assert jnp.allclose(a, b, rtol=1e-4), (method, a, b)

    print("KERNEL_OK")
</pallas_src>

<mosaic_0001>
module attributes {stable_mosaic.version = 11 : i64} {
  func.func @_dist_kernel(%arg0: i32, %arg1: memref<8x128xf32, #tpu.memory_space<vmem>>, %arg2: memref<8x128xf32, #tpu.memory_space<vmem>>, %arg3: memref<1x1x128xf32, #tpu.memory_space<vmem>>) attributes {dimension_semantics = [#tpu.dimension_semantics<parallel>], iteration_bounds = array<i64: 2>, scalar_prefetch = 0 : i64, scratch_operands = 0 : i64, tpu.core_type = #tpu.core_type<tc>, window_params = [{transform_indices = @transform_0, window_bounds = array<i64: 8, 128>}, {transform_indices = @transform_1, window_bounds = array<i64: 8, 128>}, {transform_indices = @transform_2, window_bounds = array<i64: 1, 1, 128>}]} {
    %c0 = arith.constant 0 : index
    %c0_0 = arith.constant 0 : index
    %0 = vector.load %arg1[%c0, %c0_0] : memref<8x128xf32, #tpu.memory_space<vmem>>, vector<8x128xf32>
    %c0_1 = arith.constant 0 : index
    %c0_2 = arith.constant 0 : index
    %1 = vector.load %arg2[%c0_1, %c0_2] : memref<8x128xf32, #tpu.memory_space<vmem>>, vector<8x128xf32>
    %cst = arith.constant 6.000000e+00 : f32
    %2 = vector.broadcast %cst : f32 to vector<8x128xf32>
    %3 = arith.mulf %2, %0 : vector<8x128xf32>
    %cst_3 = arith.constant 3.200000e+01 : f32
    %4 = vector.broadcast %cst_3 : f32 to vector<8x128xf32>
    %5 = arith.addf %3, %4 : vector<8x128xf32>
    %cst_4 = arith.constant 6.000000e+00 : f32
    %6 = vector.broadcast %cst_4 : f32 to vector<8x128xf32>
    %7 = arith.mulf %6, %1 : vector<8x128xf32>
    %cst_5 = arith.constant 3.200000e+01 : f32
    %8 = vector.broadcast %cst_5 : f32 to vector<8x128xf32>
    %9 = arith.addf %7, %8 : vector<8x128xf32>
    %cst_6 = arith.constant 6.000000e+00 : f32
    %10 = vector.broadcast %cst_6 : f32 to vector<8x128xf32>
    %11 = arith.mulf %10, %5 : vector<8x128xf32>
    %cst_7 = arith.constant -1.240000e+02 : f32
    %12 = vector.broadcast %cst_7 : f32 to vector<8x128xf32>
    %13 = arith.addf %11, %12 : vector<8x128xf32>
    %cst_8 = arith.constant 6.000000e+00 : f32
    %14 = vector.broadcast %cst_8 : f32 to vector<8x128xf32>
    %15 = arith.mulf %14, %9 : vector<8x128xf32>
    %cst_9 = arith.constant -1.240000e+02 : f32
    %16 = vector.broadcast %cst_9 : f32 to vector<8x128xf32>
    %17 = arith.addf %15, %16 : vector<8x128xf32>
    %18 = arith.subf %9, %5 : vector<8x128xf32>
    %19 = arith.subf %17, %13 : vector<8x128xf32>
    %20 = arith.mulf %18, %18 : vector<8x128xf32>
    %21 = arith.addf %5, %9 : vector<8x128xf32>
    %cst_10 = arith.constant 5.000000e-01 : f32
    %22 = vector.broadcast %cst_10 : f32 to vector<8x128xf32>
    %23 = arith.mulf %21, %22 : vector<8x128xf32>
    %24 = math.cos %23 : vector<8x128xf32>
    %25 = arith.mulf %19, %24 : vector<8x128xf32>
    %26 = arith.mulf %25, %25 : vector<8x128xf32>
    %27 = arith.addf %20, %26 : vector<8x128xf32>
    %cst_11 = arith.constant 1.000000e-24 : f32
    %28 = vector.broadcast %cst_11 : f32 to vector<8x128xf32>
    %29 = arith.addf %27, %28 : vector<8x128xf32>
    %30 = math.sqrt %29 : vector<8x128xf32>
    %cst_12 = arith.constant 3.440100e+03 : f32
    %31 = vector.broadcast %cst_12 : f32 to vector<8x128xf32>
    %32 = arith.mulf %31, %30 : vector<8x128xf32>
    %cst_13 = arith.constant dense<0.000000e+00> : vector<128xf32>
    %33 = vector.multi_reduction <add>, %32, %cst_13 [0] : vector<8x128xf32> to vector<128xf32>
    %34 = vector.shape_cast %33 : vector<128xf32> to vector<1x1x128xf32>
    %c0_14 = arith.constant 0 : index
    %c0_15 = arith.constant 0 : index
    %c0_16 = arith.constant 0 : index
    %35 = vector.load %arg3[%c0_14, %c0_15, %c0_16] : memref<1x1x128xf32, #tpu.memory_space<vmem>>, vector<1x1x128xf32>
    tpu.vector_store %arg3[%c0_14, %c0_15, %c0_16], %34 {strides = array<i32>} : memref<1x1x128xf32, #tpu.memory_space<vmem>>, vector<1x1x128xf32>,
    return
  }
  func.func @transform_0(%arg0: i32) -> (i32, i32) {
    %c0_i32 = arith.constant 0 : i32
    %c0_i32_0 = arith.constant 0 : i32
    return %arg0, %c0_i32 : i32, i32
  }
  func.func @transform_1(%arg0: i32) -> (i32, i32) {
    %c0_i32 = arith.constant 0 : i32
    %c0_i32_0 = arith.constant 0 : i32
    return %arg0, %c0_i32 : i32, i32
  }
  func.func @transform_2(%arg0: i32) -> (i32, i32, i32) {
    %c0_i32 = arith.constant 0 : i32
    %c0_i32_0 = arith.constant 0 : i32
    %c0_i32_1 = arith.constant 0 : i32
    return %arg0, %c0_i32, %c0_i32_0 : i32, i32, i32
  }
}

</mosaic_0001>

<llo_original>
// kernel: tpu_custom_call.1
$region0: #{tpu_custom_call.1}
  #allocation0 [shape = 'u32[]', space=smem, size = 0x4, offset = 0x4, fixed_abs, tag = 'smem constant byte address 0x4 - core index']
  #allocation1 [shape = 'u32[144,128]{1,0:T(1,128)}', space=vmem, size = 0x12000, scoped, tag = 'internal scratch']
  %s0 = inlined_call_operand.hbm [shape: f32[16,128], index: 0, kind: input, shape index: {}]
  %s1 = inlined_call_operand.hbm [shape: f32[16,128], index: 1, kind: input, shape index: {}]
  %s2 = inlined_call_operand.hbm [shape: f32[2,1,128], index: 2, kind: output, shape index: {}]
  %s3 = sld [smem:[#allocation0]]
  $region49: #{tpu_custom_call.1} parent=0
    _
  %s5 = ssub.s32 1, %s3
  %s6 = scalar_select 0, %s5, %s3
  $region1: #{tpu_custom_call.1} parent=0
    #allocation2 [shape = 'u8[8192]{0}', space=vmem, size = 0x2000, scoped, tag = 'input window, operand 0']
    #allocation3 [shape = 's32[2]{0}', space=sflag, size = 0x8, scoped, tag = 'scoped memory for tpu_custom_call.1']
    #allocation4 [shape = 's32[2]{0}', space=sflag, size = 0x8, scoped, tag = 'scoped memory for tpu_custom_call.1']
    #allocation5 [shape = 'u8[8192]{0}', space=vmem, size = 0x2000, scoped, tag = 'input window, operand 1']
    #allocation6 [shape = 's32[2]{0}', space=sflag, size = 0x8, scoped, tag = 'scoped memory for tpu_custom_call.1']
    #allocation7 [shape = 'u8[1024]{0}', space=vmem, size = 0x400, scoped, tag = 'output window, operand 0']
    %7 = vsyncpa [#allocation3], 0
    %s8 = scalar_lea.sflag [#allocation3], 1
    %9 = vsyncpa %s8, 0
    %10 = vsyncpa [#allocation6], 0
    %s11 = scalar_lea.sflag [#allocation6], 1
    %12 = vsyncpa %s11, 0
    %13 = vsyncpa [#allocation4], 0
    %s14 = scalar_lea.sflag [#allocation4], 1
    %15 = vsyncpa %s14, 0
    loop: start=0, step=1, limit=4
    $region2: #{tpu_custom_call.1} parent=1 // loop_pre_header
      _
    $region3: #{tpu_custom_call.1} parent=1 // loop_header
      %s17 = sphi 0, %s21
      %p18 = scmp.ge.s32.totalorder %s17, 4
      %s27 = sphi 0, %s29
      %s30 = sphi 0, %s27
      %s31 = sphi 0, %s30
      %s47 = sphi 0, %s31
      %s53 = sphi 0, %s55
      %s56 = sphi 0, %s53
      %s57 = sphi 0, %s56
      %s73 = sphi 0, %s57
      %s79 = sphi 0, %s81
      %s82 = sphi 0, %s79
      %s83 = sphi 0, %s82
      %s99 = sphi 0, %s83
    $region4: #{tpu_custom_call.1} parent=1 // loop_header_branch
      %20 = sbr.rel (%p18) target = $region8
    $region5: #{tpu_custom_call.1} parent=1 // loop_body
      %s22 = ssub.s32 %s17, 1
      %s23 = ssub.s32 %s17, 2
      %s24 = sadd.s32 %s17, 1
      %s25 = ssub.s32 %s17, %s24
      %p26 = scmp.eq.s32.totalorder %s25, 0
      %s28 = sadd.s32 %s27, 1
      %s29 = scalar_select %p26, %s27, %s28
      %p32 = pneg %p26
      %p33 = scmp.eq.s32.totalorder %s17, 1
      %p34 = por %p32, %p33
      %p35 = scmp.ne.s32.totalorder %s27, %s30
      %p36 = scmp.eq.s32.totalorder %s17, 0
      %p37 = por %p35, %p36
      %p38 = scmp.ne.s32.totalorder %s27, %s30
      %p39 = scmp.eq.s32.totalorder %s22, 1
      %p40 = por %p38, %p39
      %p41 = scmp.ne.s32.totalorder %s30, %s31
      %p42 = scmp.eq.s32.totalorder %s22, 0
      %p43 = por %p41, %p42
      %p44 = scmp.ne.s32.totalorder %s30, %s31
      %p45 = scmp.eq.s32.totalorder %s23, 1
      %p46 = por %p44, %p45
      %p48 = scmp.ne.s32.totalorder %s31, %s47
      %p49 = scmp.eq.s32.totalorder %s23, 0
      %p50 = por %p48, %p49
      %s51 = ssub.s32 %s17, %s24
      %p52 = scmp.eq.s32.totalorder %s51, 0
      %s54 = sadd.s32 %s53, 1
      %s55 = scalar_select %p52, %s53, %s54
      %p58 = pneg %p52
      %p59 = scmp.eq.s32.totalorder %s17, 1
      %p60 = por %p58, %p59
      %p61 = scmp.ne.s32.totalorder %s53, %s56
      %p62 = scmp.eq.s32.totalorder %s17, 0
      %p63 = por %p61, %p62
      %p64 = scmp.ne.s32.totalorder %s53, %s56
      %p65 = scmp.eq.s32.totalorder %s22, 1
      %p66 = por %p64, %p65
      %p67 = scmp.ne.s32.totalorder %s56, %s57
      %p68 = scmp.eq.s32.totalorder %s22, 0
      %p69 = por %p67, %p68
      %p70 = scmp.ne.s32.totalorder %s56, %s57
      %p71 = scmp.eq.s32.totalorder %s23, 1
      %p72 = por %p70, %p71
      %p74 = scmp.ne.s32.totalorder %s57, %s73
      %p75 = scmp.eq.s32.totalorder %s23, 0
      %p76 = por %p74, %p75
      %s77 = ssub.s32 %s17, %s24
      %p78 = scmp.eq.s32.totalorder %s77, 0
      %s80 = sadd.s32 %s79, 1
      %s81 = scalar_select %p78, %s79, %s80
      %p84 = pneg %p78
      %p85 = scmp.eq.s32.totalorder %s17, 1
      %p86 = por %p84, %p85
      %p87 = scmp.ne.s32.totalorder %s79, %s82
      %p88 = scmp.eq.s32.totalorder %s17, 0
      %p89 = por %p87, %p88
      %p90 = scmp.ne.s32.totalorder %s79, %s82
      %p91 = scmp.eq.s32.totalorder %s22, 1
      %p92 = por %p90, %p91
      %p93 = scmp.ne.s32.totalorder %s82, %s83
      %p94 = scmp.eq.s32.totalorder %s22, 0
      %p95 = por %p93, %p94
      %p96 = scmp.ne.s32.totalorder %s82, %s83
      %p97 = scmp.eq.s32.totalorder %s23, 1
      %p98 = por %p96, %p97
      %p100 = scmp.ne.s32.totalorder %s83, %s99
      %p101 = scmp.eq.s32.totalorder %s23, 0
      %p102 = por %p100, %p101
      %p103 = scmp.le.s32.totalorder 1, %s17
      %p104 = scmp.lt.s32.totalorder %s17, 3
      %p105 = pnand %p103, %p104
      %p106 = pneg %p105
      // Predicated region
      $region9: #{tpu_custom_call.1} parent=5 // pred_check
        _
      $region10: #{tpu_custom_call.1} parent=5 // pred_check_branch
        %108 = sbr.rel (%p105) target = $region12
      $region11: #{tpu_custom_call.1} parent=5 // pred_region
        %s109 = ssub.s32 %s17, 1
      $region12: #{tpu_custom_call.1} parent=5 // pred_fallthru
        _
      %p110 = scmp.lt.s32.totalorder %s17, 2
      // Predicated region
      $region13: #{tpu_custom_call.1} parent=5 // pred_check
        %p111 = pneg %p110
      $region14: #{tpu_custom_call.1} parent=5 // pred_check_branch
        %113 = sbr.rel (%p111) target = $region16
      $region15: #{tpu_custom_call.1} parent=5 // pred_region
        // Predicated region
        $region17: #{tpu_custom_call.1} parent=15 // pred_check
          %p114 = pneg %p37
        $region18: #{tpu_custom_call.1} parent=15 // pred_check_branch
          %116 = sbr.rel (%p114) target = $region20
        $region19: #{tpu_custom_call.1} parent=15 // pred_region
          %s117 = sand.u32 %s27, 1
          %s118 = scalar_lea.sflag [#allocation3], %s117
          %s119 = sand.u32 %s27, 1
          %s120 = smul.addr %s119, 8
          %s121 = scalar_lea.vmem [#allocation2], %s120
          %s123 = ssub.s32 128, 128
          %124 = vsyncadd %s118, %s123
          %s125 = smul.addr %s17, 128
          %s126 = scalar_lea.hbm %s0, %s125
          %s128 = sshll.u32 %s121, 4
          %s129 = int_to_ptr.vmem [resolvable:$true] %s128
          %131 = dma.hbm_to_vmem [thread:$0]  %s126, 128, %s129, %s118
        $region20: #{tpu_custom_call.1} parent=15 // pred_fallthru
          _
        // Predicated region
        $region21: #{tpu_custom_call.1} parent=15 // pred_check
          %p132 = pneg %p63
        $region22: #{tpu_custom_call.1} parent=15 // pred_check_branch
          %134 = sbr.rel (%p132) target = $region24
        $region23: #{tpu_custom_call.1} parent=15 // pred_region
          %s135 = sand.u32 %s53, 1
          %s136 = scalar_lea.sflag [#allocation6], %s135
          %s137 = sand.u32 %s53, 1
          %s138 = smul.addr %s137, 8
          %s139 = scalar_lea.vmem [#allocation5], %s138
          %s141 = ssub.s32 128, 128
          %142 = vsyncadd %s136, %s141
          %s143 = smul.addr %s17, 128
          %s144 = scalar_lea.hbm %s1, %s143
          %s146 = sshll.u32 %s139, 4
          %s147 = int_to_ptr.vmem [resolvable:$true] %s146
          %149 = dma.hbm_to_vmem [thread:$0]  %s144, 128, %s147, %s136
        $region24: #{tpu_custom_call.1} parent=15 // pred_fallthru
          _
      $region16: #{tpu_custom_call.1} parent=5 // pred_fallthru
        _
      %p150 = scmp.le.s32.totalorder 1, %s17
      %p151 = scmp.lt.s32.totalorder %s17, 3
      %p152 = pnand %p150, %p151
      %p153 = pneg %p152
      // Predicated region
      $region25: #{tpu_custom_call.1} parent=5 // pred_check
        _
      $region26: #{tpu_custom_call.1} parent=5 // pred_check_branch
        %155 = sbr.rel (%p152) target = $region28
      $region27: #{tpu_custom_call.1} parent=5 // pred_region
        %s156 = ssub.s32 %s17, 1
        %s157 = sand.u32 %s30, 1
        %s158 = scalar_lea.sflag [#allocation3], %s157
        %s159 = sand.u32 %s30, 1
        %s160 = smul.addr %s159, 8
        %s161 = scalar_lea.vmem [#allocation2], %s160
        // Predicated region
        $region29: #{tpu_custom_call.1} parent=27 // pred_check
          %p162 = pneg %p43
        $region30: #{tpu_custom_call.1} parent=27 // pred_check_branch
          %164 = sbr.rel (%p162) target = $region32
        $region31: #{tpu_custom_call.1} parent=27 // pred_region
          %165 = dma.done %s158, 128
        $region32: #{tpu_custom_call.1} parent=27 // pred_fallthru
          _
        %s166 = sand.u32 %s56, 1
        %s167 = scalar_lea.sflag [#allocation6], %s166
        %s168 = sand.u32 %s56, 1
        %s169 = smul.addr %s168, 8
        %s170 = scalar_lea.vmem [#allocation5], %s169
        // Predicated region
        $region33: #{tpu_custom_call.1} parent=27 // pred_check
          %p171 = pneg %p69
        $region34: #{tpu_custom_call.1} parent=27 // pred_check_branch
          %173 = sbr.rel (%p171) target = $region36
        $region35: #{tpu_custom_call.1} parent=27 // pred_region
          %174 = dma.done %s167, 128
        $region36: #{tpu_custom_call.1} parent=27 // pred_fallthru
          _
        %s175 = sand.u32 %s30, 1
        %s176 = scalar_lea.sflag [#allocation3], %s175
        %s177 = sand.u32 %s30, 1
        %s178 = smul.addr %s177, 8
        %s179 = scalar_lea.vmem [#allocation2], %s178
        %p180 = pneg %p43
        %p181 = pneg %p40
        %s182 = sand.u32 %s56, 1
        %s183 = scalar_lea.sflag [#allocation6], %s182
        %s184 = sand.u32 %s56, 1
        %s185 = smul.addr %s184, 8
        %s186 = scalar_lea.vmem [#allocation5], %s185
        %p187 = pneg %p69
        %p188 = pneg %p66
        %p189 = pneg %p95
        %p190 = pneg %p92
        %s191 = sand.u32 %s82, 1
        %s192 = scalar_lea.sflag [#allocation4], %s191
        %s193 = sand.u32 %s82, 1
        %s194 = scalar_lea.vmem [#allocation7], %s193
        %v195 = vld [vmem:[%s161] sm:$0xff]
        %v196 = vld [vmem:[%s170] sm:$0xff]
        %v197 = vmul.f32 %v195, 6.0
        %v198 = vadd.f32 %v197, 32.0
        %v199 = vmul.f32 %v196, 6.0
        %v200 = vadd.f32 %v199, 32.0
        %v201 = vmul.f32 %v198, 6.0
        %v202 = vadd.f32 %v201, -124.0
        %v203 = vmul.f32 %v200, 6.0
        %v204 = vadd.f32 %v203, -124.0
        %v205 = vsub.f32 %v200, %v198
        %v206 = vsub.f32 %v204, %v202
        %v207 = vmul.f32 %v205, %v205
        %v208 = vadd.f32 %v198, %v200
        %v209 = vmul.f32 %v208, 0.5
        %v210 = vand.u32 2147483647, %v209
        %vm211 = vcmp.le.f32.partialorder %v210, 0.7853982
        %vm212 = vcmp.lt.s32.totalorder %v209, 0
        %v213 = vand.u32 %v209, 2139095040
        %v214 = vshrl.u32 %v213, 23
        %v215 = vsub.s32 %v214, 127
        %v216 = vand.u32 2147483647, %v209
        %v217 = vand.u32 %v216, 8388607
        %v218 = vor.u32 %v217, 8388608
        %v219 = vsub.s32 0, %v218
        %v220 = vadd.s32 %v215, 1
        %vm221 = vcmp.gt.s32.totalorder %v220, 0
        %v222 = vsel %vm221, %v220, 0
        %v223 = vshrl.u32 %v222, 5
        %v224 = vand.u32 %v222, 31
        %v225 = vsub.s32 32, %v224
        %v226 = vshrl.u32 683565275, %v225
        %v227 = vshll.u32 683565275, %v224
        %v228 = vshrl.u32 2475754826, %v225
        %v229 = vor.u32 %v227, %v228
        %v230 = vshll.u32 2475754826, %v224
        %v231 = vshrl.u32 2131351028, %v225
        %v232 = vor.u32 %v230, %v231
        %v233 = vshll.u32 2131351028, %v224
        %v234 = vshrl.u32 2102212464, %v225
        %v235 = vor.u32 %v233, %v234
        %v236 = vshll.u32 2102212464, %v224
        %v237 = vshrl.u32 920167782, %v225
        %v238 = vor.u32 %v236, %v237
        %v239 = vshll.u32 920167782, %v224
        %v240 = vshrl.u32 1326507024, %v225
        %v241 = vor.u32 %v239, %v240
        %vm242 = vcmp.lt.s32.totalorder %v223, 1
        %vm243 = vcmp.lt.s32.totalorder %v223, 2
        %vm244 = vcmp.lt.s32.totalorder %v223, 3
        %vm245 = vcmp.lt.s32.totalorder %v223, 4
        %v246 = vsel %vm242, %v226, %v229
        %v247 = vsel %vm245, %v235, 2102212464
        %v248 = vsel %vm244, %v232, %v247
        %v249 = vsel %vm243, %v246, %v248
        %v250 = vsel %vm242, %v229, %v232
        %v251 = vsel %vm245, %v238, 920167782
        %v252 = vsel %vm244, %v235, %v251
        %v253 = vsel %vm243, %v250, %v252
        %v254 = vsel %vm242, %v232, %v235
        %v255 = vsel %vm245, %v241, 1326507024
        %v256 = vsel %vm244, %v238, %v255
        %v257 = vsel %vm243, %v254, %v256
        %v258 = vshll.u32 %v218, 8
        %v259 = vmul.u32.u64.compose %v258, %v257
        %v260 = vextract.low.u32 %v259
        %v261 = vextract.high.u32 %v259
        %v262 = vmul.u32.u64.compose %v258, %v253
        %v263 = vextract.low.u32 %v262
        %v264 = vextract.high.u32 %v262
        %v265 = vmul.u32 %v258, %v249
        %v266 = vadd.s32 %v261, %v263
        %vm267 = vc.u32 %v261, %v263
        %v268 = vadd.s32 %v264, 1
        %v269 = vsel %vm267, %v268, %v264
        %v270 = vadd.s32 %v265, %v269
        %v271 = vadd.s32 %v270, 536870912
        %v272 = vshrl.u32 %v271, 30
        %v273 = vshll.u32 %v272, 30
        %v274 = vsub.s32 %v270, %v273
        %vm275 = vcmp.lt.s32.totalorder %v274, 0
        %v276 = vsub.s32 0, %v274
        %v277 = vsel %vm275, %v276, %v274
        %v278 = vclz %v277
        %v279 = vsub.s32 %v278, 2
        %vm280 = vcmp.gt.s32.totalorder 0, %v279
        %v281 = vsel %vm280, 0, %v279
        %v282 = vsub.s32 32, %v281
        %v283 = vshll.u32 %v274, %v281
        %v284 = vshrl.u32 %v266, %v282
        %v285 = vor.u32 %v283, %v284
        %v286 = vsub.s32 4294967266, %v281
        %v287 = vadd.s32 %v286, 127
        %v288 = vshll.u32 %v287, 23
        %v289 = vor.u32 4788187, %v288
        %v290 = vand.u32 2147483647, %v289
        %v292 = vcvt.s32.f32 %v285
        %v293 = vmul.f32 %v292, %v290
        %v294 = vxor.u32 %v293, 2147483648
        %v295 = vsel %vm212, %v294, %v293
        %v296 = vsub.s32 4, %v272
        %v297 = vsel %vm212, %v296, %v272
        %v298 = vsel %vm211, %v209, %v295
        %v299 = vsel %vm211, 0, %v297
        %v300 = vcosq.f32.pop %v298
        %v301 = vsinq.f32.pop %v298
        %vm302 = vweird.f32 %v209
        %v303 = vand.u32 %v299, 3
        %vm304 = vcmp.lt.s32.totalorder %v303, 2
        %vm305 = vcmp.eq.s32.totalorder %v303, 0
        %v306 = vxor.u32 %v301, 2147483648
        %v307 = vsel %vm305, %v300, %v306
        %vm308 = vcmp.eq.s32.totalorder %v303, 2
        %v309 = vxor.u32 %v300, 2147483648
        %v310 = vsel %vm308, %v309, %v301
        %v311 = vsel %vm304, %v307, %v310
        %v312 = vsel %vm302, nan, %v311
        %v313 = vmul.f32 %v206, %v312
        %v314 = vmul.f32 %v313, %v313
        %v315 = vadd.f32 %v207, %v314
        %v316 = vadd.f32 %v315, 1e-24
        %v317 = vrsqrt.pop %v316
        %v318 = vmul.f32 %v316, %v317
        %vm319 = vcmp.eq.f32.partialorder %v316, inf
        %v320 = vsel %vm319, %v316, %v318
        %vm321 = vcmp.eq.f32.partialorder %v316, 0.0
        %v322 = vand.u32 %v316, 2147483648
        %v323 = vsel %vm321, %v322, %v320
        %v324 = vmul.f32 %v323, 3440.1
        %v325 = vrot.slane %v324, 4
        %v326 = vadd.f32 %v324, %v325
        %v327 = vrot.slane %v326, 2
        %v328 = vadd.f32 %v326, %v327
        %v329 = vrot.slane %v328, 1
        %v330 = vadd.f32 %v328, %v329
        %331 = vst [vmem:[%s194] sm:$0x1] %v330
        %s332 = sand.u32 %s82, 1
        %s333 = scalar_lea.sflag [#allocation4], %s332
        %s334 = sand.u32 %s82, 1
        %s335 = scalar_lea.vmem [#allocation7], %s334
        // Predicated region
        $region37: #{tpu_custom_call.1} parent=27 // pred_check
          %p336 = pneg %p92
        $region38: #{tpu_custom_call.1} parent=27 // pred_check_branch
          %338 = sbr.rel (%p336) target = $region40
        $region39: #{tpu_custom_call.1} parent=27 // pred_region
          %s340 = ssub.s32 16, 16
          %341 = vsyncadd %s333, %s340
          %s342 = smul.addr %s22, 16
          %s343 = scalar_lea.hbm %s2, %s342
          %s345 = sshll.u32 %s335, 4
          %s346 = int_to_ptr.vmem [resolvable:$true] %s345
          %348 = dma.vmem_to_hbm [thread:$0]  %s346, 16, %s343, %s333
        $region40: #{tpu_custom_call.1} parent=27 // pred_fallthru
          _
      $region28: #{tpu_custom_call.1} parent=5 // pred_fallthru
        _
      %p349 = scmp.le.s32.totalorder 2, %s17
      // Predicated region
      $region41: #{tpu_custom_call.1} parent=5 // pred_check
        %p350 = pneg %p349
      $region42: #{tpu_custom_call.1} parent=5 // pred_check_branch
        %352 = sbr.rel (%p350) target = $region44
      $region43: #{tpu_custom_call.1} parent=5 // pred_region
        %s353 = ssub.s32 %s17, 2
        // Predicated region
        $region45: #{tpu_custom_call.1} parent=43 // pred_check
          %p354 = pneg %p98
        $region46: #{tpu_custom_call.1} parent=43 // pred_check_branch
          %356 = sbr.rel (%p354) target = $region48
        $region47: #{tpu_custom_call.1} parent=43 // pred_region
          %s357 = sand.u32 %s83, 1
          %s358 = scalar_lea.sflag [#allocation4], %s357
          %s359 = sand.u32 %s83, 1
          %s360 = scalar_lea.vmem [#allocation7], %s359
          %361 = dma.done %s358, 16
        $region48: #{tpu_custom_call.1} parent=43 // pred_fallthru
          _
      $region44: #{tpu_custom_call.1} parent=5 // pred_fallthru
        _
    $region6: #{tpu_custom_call.1} parent=1 // loop_footer
      %s21 = sadd.s32 1, %s17
    $region7: #{tpu_custom_call.1} parent=1 // loop_footer_branch
      %16 = sbr.rel target = $region3
    $region8: #{tpu_custom_call.1} parent=1 // loop_exit
      _
    %362 = vsyncpa [#allocation3], 1
    %s363 = scalar_lea.sflag [#allocation3], 1
    %364 = vsyncpa %s363, 1
    %365 = vsyncpa [#allocation6], 1
    %s366 = scalar_lea.sflag [#allocation6], 1
    %367 = vsyncpa %s366, 1
    %368 = vsyncpa [#allocation4], 1
    %s369 = scalar_lea.sflag [#allocation4], 1
    %370 = vsyncpa %s369, 1

</llo_original>
